<compile_context>
chip_gen: v7x
topology: tpu7x:2x2x1
jax: 0.10.0
libtpu: 0.0.40
codegen_flags: <defaults>
</compile_context>

<pallas_src>
import math
import jax
import jax.numpy as jnp
from jax.experimental import pallas as pl
from jax.experimental.pallas import tpu as pltpu


# ---------------------------------------------------------------------------
# Pallas kernel: fused patch-merge + projection for one tile of rows.
# ---------------------------------------------------------------------------
def _token_merge_kernel(x_ref, w_ref, o_ref):
    # x_ref : (TM, nh, w, C)   activation rows, patch rows still interleaved (C = nw*E)
    # w_ref : (nh, C, OUT)     projection weight, split per patch row (VMEM-resident)
    # o_ref : (TM*w, OUT)      lane-dense output slab
    tm, nh, w, c = x_ref.shape
    out = o_ref.shape[-1]

    xb = x_ref[...]
    wb = w_ref[...]

    acc = jnp.zeros((tm * w, out), jnp.float32)
    for ih in range(nh):                               # nh is tiny -> static unroll
        xi = xb[:, ih].reshape(tm * w, c)              # last dim unchanged -> cheap
        acc = acc + jnp.dot(xi, wb[ih], preferred_element_type=jnp.float32)
    o_ref[...] = acc.astype(o_ref.dtype)


# ---------------------------------------------------------------------------
# Wrapper
# ---------------------------------------------------------------------------
def token_merge(x, weight, patch_size=(2, 2), *, out_dtype=None,
                vmem_budget_bytes=8 * 1024 * 1024):
    """TokenMerge forward.

    x      : (..., H, W, E)
    weight : (out_features, nh*nw*E)  -- PyTorch nn.Linear layout, bias-free
    returns: (..., H//nh, W//nw, out_features)
    """
    nh, nw = patch_size
    *lead, H, W, E = x.shape
    assert H % nh == 0 and W % nw == 0, "spatial dims must be divisible by patch size"
    h, w = H // nh, W // nw
    out_features, in_features = weight.shape
    assert in_features == nh * nw * E

    B = math.prod(lead)
    M = B * h                      # row dimension we tile over
    C = nw * E                     # per-patch-row feature width
    K = nh * C
    out_dtype = out_dtype or x.dtype

    # Copy-free reshapes only (no transpose materialized in HBM).
    x2 = x.reshape(M, nh, w, C)                                   # (M, nh, w, C)
    w3 = jnp.transpose(weight).reshape(nh, C, out_features)       # tiny, one-time

    itemsize = x2.dtype.itemsize
    out_itemsize = jnp.dtype(out_dtype).itemsize

    # Tile size: double-buffered (input + output) tiles under a conservative
    # VMEM budget; multiple of 8 so the (TM*w, OUT) output block keeps its
    # second-minor dim sublane-aligned; no larger than (padded) M.
    per_row_bytes = 2 * (nh * w * C * itemsize + w * out_features * out_itemsize)
    budget_tm = max(8, (vmem_budget_bytes // per_row_bytes) // 8 * 8)
    tile_m = max(8, min(budget_tm, -(-M // 8) * 8))

    m_pad = pl.cdiv(M, tile_m) * tile_m
    if m_pad != M:
        x2 = jnp.pad(x2, ((0, m_pad - M), (0, 0), (0, 0), (0, 0)))

    grid = (m_pad // tile_m,)

    cost = pl.CostEstimate(
        flops=2 * M * w * K * out_features,
        transcendentals=0,
        bytes_accessed=(M * nh * w * C * itemsize
                        + nh * C * out_features * itemsize
                        + M * w * out_features * out_itemsize),
    )

    out2 = pl.pallas_call(
        _token_merge_kernel,
        out_shape=jax.ShapeDtypeStruct((m_pad * w, out_features), out_dtype),
        grid_spec=pltpu.PrefetchScalarGridSpec(
            num_scalar_prefetch=0,
            grid=grid,
            in_specs=[
                # activation row tiles: pipelined / double-buffered over the grid
                pl.BlockSpec((tile_m, nh, w, C), lambda i: (i, 0, 0, 0)),
                # weight: constant index_map -> stays VMEM-resident across steps
                pl.BlockSpec((nh, C, out_features), lambda i: (0, 0, 0)),
            ],
            out_specs=pl.BlockSpec((tile_m * w, out_features), lambda i: (i, 0)),
        ),
        compiler_params=pltpu.CompilerParams(
            dimension_semantics=("parallel",),   # shards row tiles across v7x's 2 TCs
        ),
        cost_estimate=cost,
    )(x2, w3)

    out2 = out2[: M * w]
    return out2.reshape(*lead, h, w, out_features)


# ---------------------------------------------------------------------------
# Pure-JAX reference (einops rearrange + x @ W.T), for a sanity check.
# ---------------------------------------------------------------------------
def reference_token_merge(x, weight, patch_size=(2, 2)):
    nh, nw = patch_size
    *lead, H, W, E = x.shape
    h, w = H // nh, W // nw
    xr = x.reshape(*lead, h, nh, w, nw, E)
    xr = jnp.swapaxes(xr, -4, -3)                     # ... h w nh nw e
    xr = xr.reshape(*lead, h, w, nh * nw * E)         # ... h w (nh nw e)
    return xr @ weight.T


if __name__ == "__main__":
    key = jax.random.PRNGKey(0)
    k_x, k_w = jax.random.split(key)

    # Small shapes consistent with the module: x (B, H, W, E), patch (2, 2),
    # in_features = E = 64, out_features = 128 (lane-dense output).
    B, H, W, E = 2, 16, 16, 64
    patch = (2, 2)
    out_features = 128
    in_features = E * patch[0] * patch[1]

    # Quarter-integer values: exactly representable in bf16, so the kernel's
    # MXU result matches the XLA reference bit-for-bit regardless of the
    # matmul pass count -> tight tolerance is meaningful.
    x = jax.random.randint(k_x, (B, H, W, E), -4, 5).astype(jnp.float32) * 0.25
    weight = jax.random.randint(k_w, (out_features, in_features), -4, 5
                                ).astype(jnp.float32) * 0.25

    out = token_merge(x, weight, patch_size=patch)
    out = jax.block_until_ready(out)

    ref = reference_token_merge(x, weight, patch_size=patch)
    assert out.shape == (B, H // patch[0], W // patch[1], out_features), out.shape
    assert jnp.allclose(out, ref, atol=1e-5, rtol=1e-5), float(
        jnp.max(jnp.abs(out - ref)))

    print("KERNEL_OK")
</pallas_src>

<mosaic_0001>
module attributes {stable_mosaic.version = 11 : i64} {
  func.func @_token_merge_kernel(%arg0: i32, %arg1: memref<16x2x8x128xf32, #tpu.memory_space<vmem>>, %arg2: memref<2x128x128xf32, #tpu.memory_space<vmem>>, %arg3: memref<128x128xf32, #tpu.memory_space<vmem>>) attributes {dimension_semantics = [#tpu.dimension_semantics<parallel>], iteration_bounds = array<i64: 1>, scalar_prefetch = 0 : i64, scratch_operands = 0 : i64, tpu.core_type = #tpu.core_type<tc>, window_params = [{transform_indices = @transform_0, window_bounds = array<i64: 16, 2, 8, 128>}, {pipeline_mode = #tpu.pipeline_mode<synchronous>, transform_indices = @transform_1, window_bounds = array<i64: 2, 128, 128>}, {transform_indices = @transform_2, window_bounds = array<i64: 128, 128>}]} {
    %c0 = arith.constant 0 : index
    %c0_0 = arith.constant 0 : index
    %c0_1 = arith.constant 0 : index
    %c0_2 = arith.constant 0 : index
    %0 = vector.load %arg1[%c0, %c0_0, %c0_1, %c0_2] : memref<16x2x8x128xf32, #tpu.memory_space<vmem>>, vector<16x2x8x128xf32>
    %c0_3 = arith.constant 0 : index
    %c0_4 = arith.constant 0 : index
    %c0_5 = arith.constant 0 : index
    %1 = vector.load %arg2[%c0_3, %c0_4, %c0_5] : memref<2x128x128xf32, #tpu.memory_space<vmem>>, vector<2x128x128xf32>
    %cst = arith.constant 0.000000e+00 : f32
    %2 = vector.broadcast %cst : f32 to vector<128x128xf32>
    %3 = vector.extract_strided_slice %0 {offsets = [0, 0, 0, 0], sizes = [16, 1, 8, 128], strides = [1, 1, 1, 1]} : vector<16x2x8x128xf32> to vector<16x1x8x128xf32>
    %4 = vector.shape_cast %3 : vector<16x1x8x128xf32> to vector<16x8x128xf32>
    %5 = vector.shape_cast %4 : vector<16x8x128xf32> to vector<128x128xf32>
    %6 = vector.extract_strided_slice %1 {offsets = [0, 0, 0], sizes = [1, 128, 128], strides = [1, 1, 1]} : vector<2x128x128xf32> to vector<1x128x128xf32>
    %7 = vector.shape_cast %6 : vector<1x128x128xf32> to vector<128x128xf32>
    %cst_6 = arith.constant dense<0.000000e+00> : vector<128x128xf32>
    %8 = tpu.matmul %5, %7, %cst_6 {dimension_numbers = #tpu.dot_dimension_numbers<[1], [0], [0], [1], [0, 0, 1, 1], [], []>} : vector<128x128xf32>, vector<128x128xf32>, vector<128x128xf32> -> vector<128x128xf32>
    %9 = arith.addf %2, %8 : vector<128x128xf32>
    %10 = vector.extract_strided_slice %0 {offsets = [0, 1, 0, 0], sizes = [16, 1, 8, 128], strides = [1, 1, 1, 1]} : vector<16x2x8x128xf32> to vector<16x1x8x128xf32>
    %11 = vector.shape_cast %10 : vector<16x1x8x128xf32> to vector<16x8x128xf32>
    %12 = vector.shape_cast %11 : vector<16x8x128xf32> to vector<128x128xf32>
    %13 = vector.extract_strided_slice %1 {offsets = [1, 0, 0], sizes = [1, 128, 128], strides = [1, 1, 1]} : vector<2x128x128xf32> to vector<1x128x128xf32>
    %14 = vector.shape_cast %13 : vector<1x128x128xf32> to vector<128x128xf32>
    %cst_7 = arith.constant dense<0.000000e+00> : vector<128x128xf32>
    %15 = tpu.matmul %12, %14, %cst_7 {dimension_numbers = #tpu.dot_dimension_numbers<[1], [0], [0], [1], [0, 0, 1, 1], [], []>} : vector<128x128xf32>, vector<128x128xf32>, vector<128x128xf32> -> vector<128x128xf32>
    %16 = arith.addf %9, %15 : vector<128x128xf32>
    %c0_8 = arith.constant 0 : index
    %c0_9 = arith.constant 0 : index
    %17 = vector.load %arg3[%c0_8, %c0_9] : memref<128x128xf32, #tpu.memory_space<vmem>>, vector<128x128xf32>
    tpu.vector_store %arg3[%c0_8, %c0_9], %16 {strides = array<i32>} : memref<128x128xf32, #tpu.memory_space<vmem>>, vector<128x128xf32>,
    return
  }
  func.func @transform_0(%arg0: i32) -> (i32, i32, i32, i32) {
    %c0_i32 = arith.constant 0 : i32
    %c0_i32_0 = arith.constant 0 : i32
    %c0_i32_1 = arith.constant 0 : i32
    %c0_i32_2 = arith.constant 0 : i32
    return %arg0, %c0_i32, %c0_i32_0, %c0_i32_1 : i32, i32, i32, i32
  }
  func.func @transform_1(%arg0: i32) -> (i32, i32, i32) {
    %c0_i32 = arith.constant 0 : i32
    %c0_i32_0 = arith.constant 0 : i32
    %c0_i32_1 = arith.constant 0 : i32
    %c0_i32_2 = arith.constant 0 : i32
    return %c0_i32, %c0_i32_0, %c0_i32_1 : i32, i32, i32
  }
  func.func @transform_2(%arg0: i32) -> (i32, i32) {
    %c0_i32 = arith.constant 0 : i32
    %c0_i32_0 = arith.constant 0 : i32
    return %arg0, %c0_i32 : i32, i32
  }
}

</mosaic_0001>

<llo_original>
// kernel: tpu_custom_call.1
$region0: #{tpu_custom_call.1}
  #allocation0 [shape = 'u32[]', space=smem, size = 0x4, offset = 0x4, fixed_abs, tag = 'smem constant byte address 0x4 - core index']
  #allocation1 [shape = 'u32[144,128]{1,0:T(1,128)}', space=vmem, size = 0x12000, scoped, tag = 'internal scratch']
  %s0 = inlined_call_operand.hbm [shape: f32[16,2,8,128], index: 0, kind: input, shape index: {}]
  %s1 = inlined_call_operand.hbm [shape: f32[2,128,128], index: 1, kind: input, shape index: {}]
  %s2 = inlined_call_operand.hbm [shape: f32[128,128], index: 2, kind: output, shape index: {}]
  %s3 = sld [smem:[#allocation0]]
  $region26: #{tpu_custom_call.1} parent=0
    _
  %s5 = ssub.s32 1, %s3
  %s6 = scalar_select 0, %s5, %s3
  $region1: #{tpu_custom_call.1} parent=0
    #allocation2 [shape = 'u8[131072]{0}', space=vmem, size = 0x20000, scoped, tag = 'input window, operand 0, single buffered']
    #allocation3 [shape = 's32[1]{0}', space=sflag, size = 0x4, scoped, tag = 'scoped memory for tpu_custom_call.1']
    #allocation4 [shape = 's32[1]{0}', space=sflag, size = 0x4, scoped, tag = 'scoped memory for tpu_custom_call.1']
    #allocation5 [shape = 'u8[131072]{0}', space=vmem, size = 0x20000, scoped, tag = 'input window, operand 1, single buffered']
    #allocation6 [shape = 's32[1]{0}', space=sflag, size = 0x4, scoped, tag = 'scoped memory for tpu_custom_call.1']
    #allocation7 [shape = 'u8[65536]{0}', space=vmem, size = 0x10000, scoped, tag = 'output window, operand 0, single buffered']
    %7 = vsyncpa [#allocation3], 0
    %8 = vsyncpa [#allocation6], 0
    %9 = vsyncpa [#allocation4], 0
    // Predicated region
    $region2: #{tpu_custom_call.1} parent=1 // pred_check
      _
    $region3: #{tpu_custom_call.1} parent=1 // pred_check_branch
      %11 = sbr.rel (0) target = $region5
    $region4: #{tpu_custom_call.1} parent=1 // pred_region
      %s13 = ssub.s32 4096, 4096
      %14 = vsyncadd [#allocation3], %s13
      %s15 = sshll.u32 [#allocation2], 4
      %s16 = int_to_ptr.vmem [resolvable:$true] %s15
      %21 = dma.hbm_to_vmem [thread:$0]  %s0, 4096, %s16, [#allocation3], 128, 128, 8
    $region5: #{tpu_custom_call.1} parent=1 // pred_fallthru
      _
    // Predicated region
    $region6: #{tpu_custom_call.1} parent=1 // pred_check
      _
    $region7: #{tpu_custom_call.1} parent=1 // pred_check_branch
      %23 = sbr.rel (0) target = $region9
    $region8: #{tpu_custom_call.1} parent=1 // pred_region
      %s25 = ssub.s32 4096, 4096
      %26 = vsyncadd [#allocation6], %s25
      %s27 = sshll.u32 [#allocation5], 4
      %s28 = int_to_ptr.vmem [resolvable:$true] %s27
      %33 = dma.hbm_to_vmem [thread:$0]  %s1, 4096, %s28, [#allocation6], 128, 128, 8
    $region9: #{tpu_custom_call.1} parent=1 // pred_fallthru
      _
    // Predicated region
    $region10: #{tpu_custom_call.1} parent=1 // pred_check
      _
    $region11: #{tpu_custom_call.1} parent=1 // pred_check_branch
      %35 = sbr.rel (0) target = $region13
    $region12: #{tpu_custom_call.1} parent=1 // pred_region
      %36 = dma.done [#allocation3], 4096
    $region13: #{tpu_custom_call.1} parent=1 // pred_fallthru
      _
    // Predicated region
    $region14: #{tpu_custom_call.1} parent=1 // pred_check
      _
    $region15: #{tpu_custom_call.1} parent=1 // pred_check_branch
      %38 = sbr.rel (0) target = $region17
    $region16: #{tpu_custom_call.1} parent=1 // pred_region
      %39 = dma.done [#allocation6], 4096
    $region17: #{tpu_custom_call.1} parent=1 // pred_fallthru
      _
    %v40 = vld [vmem:[#allocation2] sm:$0xff]
    %v41 = vld [vmem:[#allocation2 + $0x8] sm:$0xff]
    %v42 = vld [vmem:[#allocation2 + $0x10] sm:$0xff]
    %v43 = vld [vmem:[#allocation2 + $0x18] sm:$0xff]
    %v44 = vld [vmem:[#allocation2 + $0x20] sm:$0xff]
    %v45 = vld [vmem:[#allocation2 + $0x28] sm:$0xff]
    %v46 = vld [vmem:[#allocation2 + $0x30] sm:$0xff]
    %v47 = vld [vmem:[#allocation2 + $0x38] sm:$0xff]
    %v48 = vld [vmem:[#allocation2 + $0x40] sm:$0xff]
    %v49 = vld [vmem:[#allocation2 + $0x48] sm:$0xff]
    %v50 = vld [vmem:[#allocation2 + $0x50] sm:$0xff]
    %v51 = vld [vmem:[#allocation2 + $0x58] sm:$0xff]
    %v52 = vld [vmem:[#allocation2 + $0x60] sm:$0xff]
    %v53 = vld [vmem:[#allocation2 + $0x68] sm:$0xff]
    %v54 = vld [vmem:[#allocation2 + $0x70] sm:$0xff]
    %v55 = vld [vmem:[#allocation2 + $0x78] sm:$0xff]
    %v56 = vld [vmem:[#allocation2 + $0x80] sm:$0xff]
    %v57 = vld [vmem:[#allocation2 + $0x88] sm:$0xff]
    %v58 = vld [vmem:[#allocation2 + $0x90] sm:$0xff]
    %v59 = vld [vmem:[#allocation2 + $0x98] sm:$0xff]
    %v60 = vld [vmem:[#allocation2 + $0xa0] sm:$0xff]
    %v61 = vld [vmem:[#allocation2 + $0xa8] sm:$0xff]
    %v62 = vld [vmem:[#allocation2 + $0xb0] sm:$0xff]
    %v63 = vld [vmem:[#allocation2 + $0xb8] sm:$0xff]
    %v64 = vld [vmem:[#allocation2 + $0xc0] sm:$0xff]
    %v65 = vld [vmem:[#allocation2 + $0xc8] sm:$0xff]
    %v66 = vld [vmem:[#allocation2 + $0xd0] sm:$0xff]
    %v67 = vld [vmem:[#allocation2 + $0xd8] sm:$0xff]
    %v68 = vld [vmem:[#allocation2 + $0xe0] sm:$0xff]
    %v69 = vld [vmem:[#allocation2 + $0xe8] sm:$0xff]
    %v70 = vld [vmem:[#allocation2 + $0xf0] sm:$0xff]
    %v71 = vld [vmem:[#allocation2 + $0xf8] sm:$0xff]
    %v72 = vld [vmem:[#allocation5] sm:$0xff]
    %v73 = vld [vmem:[#allocation5 + $0x8] sm:$0xff]
    %v74 = vld [vmem:[#allocation5 + $0x10] sm:$0xff]
    %v75 = vld [vmem:[#allocation5 + $0x18] sm:$0xff]
    %v76 = vld [vmem:[#allocation5 + $0x20] sm:$0xff]
    %v77 = vld [vmem:[#allocation5 + $0x28] sm:$0xff]
    %v78 = vld [vmem:[#allocation5 + $0x30] sm:$0xff]
    %v79 = vld [vmem:[#allocation5 + $0x38] sm:$0xff]
    %v80 = vld [vmem:[#allocation5 + $0x40] sm:$0xff]
    %v81 = vld [vmem:[#allocation5 + $0x48] sm:$0xff]
    %v82 = vld [vmem:[#allocation5 + $0x50] sm:$0xff]
    %v83 = vld [vmem:[#allocation5 + $0x58] sm:$0xff]
    %v84 = vld [vmem:[#allocation5 + $0x60] sm:$0xff]
    %v85 = vld [vmem:[#allocation5 + $0x68] sm:$0xff]
    %v86 = vld [vmem:[#allocation5 + $0x70] sm:$0xff]
    %v87 = vld [vmem:[#allocation5 + $0x78] sm:$0xff]
    %v88 = vld [vmem:[#allocation5 + $0x80] sm:$0xff]
    %v89 = vld [vmem:[#allocation5 + $0x88] sm:$0xff]
    %v90 = vld [vmem:[#allocation5 + $0x90] sm:$0xff]
    %v91 = vld [vmem:[#allocation5 + $0x98] sm:$0xff]
    %v92 = vld [vmem:[#allocation5 + $0xa0] sm:$0xff]
    %v93 = vld [vmem:[#allocation5 + $0xa8] sm:$0xff]
    %v94 = vld [vmem:[#allocation5 + $0xb0] sm:$0xff]
    %v95 = vld [vmem:[#allocation5 + $0xb8] sm:$0xff]
    %v96 = vld [vmem:[#allocation5 + $0xc0] sm:$0xff]
    %v97 = vld [vmem:[#allocation5 + $0xc8] sm:$0xff]
    %v98 = vld [vmem:[#allocation5 + $0xd0] sm:$0xff]
    %v99 = vld [vmem:[#allocation5 + $0xd8] sm:$0xff]
    %v100 = vld [vmem:[#allocation5 + $0xe0] sm:$0xff]
    %v101 = vld [vmem:[#allocation5 + $0xe8] sm:$0xff]
    %v102 = vld [vmem:[#allocation5 + $0xf0] sm:$0xff]
    %v103 = vld [vmem:[#allocation5 + $0xf8] sm:$0xff]
    %104 = vmatprep.subr.mxu0 0.0
    %105 = vmatpush1.msra.mxu0 %v88
    %106 = vmatprep.subr.mxu0 0.0
    %107 = vmatpush1.msra.mxu0 %v89
    %108 = vmatprep.subr.mxu0 0.0
    %109 = vmatpush1.msra.mxu0 %v90
    %110 = vmatprep.subr.mxu0 0.0
    %111 = vmatpush1.msra.mxu0 %v91
    %112 = vmatprep.subr.mxu0 0.0
    %113 = vmatpush1.msra.mxu0 %v92
    %114 = vmatprep.subr.mxu0 0.0
    %115 = vmatpush1.msra.mxu0 %v93
    %116 = vmatprep.subr.mxu0 0.0
    %117 = vmatpush1.msra.mxu0 %v94
    %118 = vmatprep.subr.mxu0 0.0
    %119 = vmatpush1.msra.mxu0 %v95
    %120 = vmatprep.subr.mxu0 0.0
    %121 = vmatpush1.msra.mxu0 %v96
    %122 = vmatprep.subr.mxu0 0.0
    %123 = vmatpush1.msra.mxu0 %v97
    %124 = vmatprep.subr.mxu0 0.0
    %125 = vmatpush1.msra.mxu0 %v98
    %126 = vmatprep.subr.mxu0 0.0
    %127 = vmatpush1.msra.mxu0 %v99
    %128 = vmatprep.subr.mxu0 0.0
    %129 = vmatpush1.msra.mxu0 %v100
    %130 = vmatprep.subr.mxu0 0.0
    %131 = vmatpush1.msra.mxu0 %v101
    %132 = vmatprep.subr.mxu0 0.0
    %133 = vmatpush1.msra.mxu0 %v102
    %134 = vmatprep.subr.mxu0 0.0
    %135 = vmatpush1.msra.mxu0 %v103
    %136 = vmatprep.subr.mxu0 0.0
    %137 = vmatpush1.msra.mxu0 0.0
    %138 = vmatprep.subr.mxu0 0.0
    %139 = vmatpush1.msra.mxu0 0.0
    %140 = vmatprep.subr.mxu0 0.0
    %141 = vmatpush1.msra.mxu0 0.0
    %142 = vmatprep.subr.mxu0 0.0
    %143 = vmatpush1.msra.mxu0 0.0
    %144 = vmatprep.subr.mxu0 0.0
    %145 = vmatpush1.msra.mxu0 0.0
    %146 = vmatprep.subr.mxu0 0.0
    %147 = vmatpush1.msra.mxu0 0.0
    %148 = vmatprep.subr.mxu0 0.0
    %149 = vmatpush1.msra.mxu0 0.0
    %150 = vmatprep.subr.mxu0 0.0
    %151 = vmatpush1.msra.mxu0 0.0
    %152 = vmatprep.subr.mxu0 0.0
    %153 = vmatpush1.msra.mxu0 0.0
    %154 = vmatprep.subr.mxu0 0.0
    %155 = vmatpush1.msra.mxu0 0.0
    %156 = vmatprep.subr.mxu0 0.0
    %157 = vmatpush1.msra.mxu0 0.0
    %158 = vmatprep.subr.mxu0 0.0
    %159 = vmatpush1.msra.mxu0 0.0
    %160 = vmatprep.subr.mxu0 0.0
    %161 = vmatpush1.msra.mxu0 0.0
    %162 = vmatprep.subr.mxu0 0.0
    %163 = vmatpush1.msra.mxu0 0.0
    %164 = vmatprep.subr.mxu0 0.0
    %165 = vmatpush1.msra.mxu0 0.0
    %166 = vmatprep.subr.mxu0 0.0
    %167 = vmatpush1.msra.mxu0 0.0
    %168 = vmatprep.mubr.f32.mxu0 0.0
    %169 = vmatmul.mubr.f32.gmra.mrb[0].mxu0 %v41
    %v170 = vpop.f32.mrb[0].mxu0
    %v171 = vadd.f32 0.0, %v170
    %v172 = vpop.f32.mrb[0].mxu0
    %173 = vmatprep.mubr.f32.mxu0 0.0
    %174 = vmatmul.mubr.f32.gmra.mrb[0].mxu0 %v43
    %v175 = vpop.f32.mrb[0].mxu0
    %v176 = vadd.f32 0.0, %v175
    %v177 = vpop.f32.mrb[0].mxu0
    %178 = vmatprep.mubr.f32.mxu0 0.0
    %179 = vmatmul.mubr.f32.gmra.mrb[0].mxu0 %v45
    %v180 = vpop.f32.mrb[0].mxu0
    %v181 = vadd.f32 0.0, %v180
    %v182 = vpop.f32.mrb[0].mxu0
    %183 = vmatprep.mubr.f32.mxu0 0.0
    %184 = vmatmul.mubr.f32.gmra.mrb[0].mxu0 %v47
    %v185 = vpop.f32.mrb[0].mxu0
    %v186 = vadd.f32 0.0, %v185
    %v187 = vpop.f32.mrb[0].mxu0
    %188 = vmatprep.mubr.f32.mxu0 0.0
    %189 = vmatmul.mubr.f32.gmra.mrb[0].mxu0 %v49
    %v190 = vpop.f32.mrb[0].mxu0
    %v191 = vadd.f32 0.0, %v190
    %v192 = vpop.f32.mrb[0].mxu0
    %193 = vmatprep.mubr.f32.mxu0 0.0
    %194 = vmatmul.mubr.f32.gmra.mrb[0].mxu0 %v51
    %v195 = vpop.f32.mrb[0].mxu0
    %v196 = vadd.f32 0.0, %v195
    %v197 = vpop.f32.mrb[0].mxu0
    %198 = vmatprep.mubr.f32.mxu0 0.0
    %199 = vmatmul.mubr.f32.gmra.mrb[0].mxu0 %v53
    %v200 = vpop.f32.mrb[0].mxu0
    %v201 = vadd.f32 0.0, %v200
    %v202 = vpop.f32.mrb[0].mxu0
    %203 = vmatprep.mubr.f32.mxu0 0.0
    %204 = vmatmul.mubr.f32.gmra.mrb[0].mxu0 %v55
    %v205 = vpop.f32.mrb[0].mxu0
    %v206 = vadd.f32 0.0, %v205
    %v207 = vpop.f32.mrb[0].mxu0
    %208 = vmatprep.mubr.f32.mxu0 0.0
    %209 = vmatmul.mubr.f32.gmra.mrb[0].mxu0 %v57
    %v210 = vpop.f32.mrb[0].mxu0
    %v211 = vadd.f32 0.0, %v210
    %v212 = vpop.f32.mrb[0].mxu0
    %213 = vmatprep.mubr.f32.mxu0 0.0
    %214 = vmatmul.mubr.f32.gmra.mrb[0].mxu0 %v59
    %v215 = vpop.f32.mrb[0].mxu0
    %v216 = vadd.f32 0.0, %v215
    %v217 = vpop.f32.mrb[0].mxu0
    %218 = vmatprep.mubr.f32.mxu0 0.0
    %219 = vmatmul.mubr.f32.gmra.mrb[0].mxu0 %v61
    %v220 = vpop.f32.mrb[0].mxu0
    %v221 = vadd.f32 0.0, %v220
    %v222 = vpop.f32.mrb[0].mxu0
    %223 = vmatprep.mubr.f32.mxu0 0.0
    %224 = vmatmul.mubr.f32.gmra.mrb[0].mxu0 %v63
    %v225 = vpop.f32.mrb[0].mxu0
    %v226 = vadd.f32 0.0, %v225
    %v227 = vpop.f32.mrb[0].mxu0
    %228 = vmatprep.mubr.f32.mxu0 0.0
    %229 = vmatmul.mubr.f32.gmra.mrb[0].mxu0 %v65
    %v230 = vpop.f32.mrb[0].mxu0
    %v231 = vadd.f32 0.0, %v230
    %v232 = vpop.f32.mrb[0].mxu0
    %233 = vmatprep.mubr.f32.mxu0 0.0
    %234 = vmatmul.mubr.f32.gmra.mrb[0].mxu0 %v67
    %v235 = vpop.f32.mrb[0].mxu0
    %v236 = vadd.f32 0.0, %v235
    %v237 = vpop.f32.mrb[0].mxu0
    %238 = vmatprep.mubr.f32.mxu0 0.0
    %239 = vmatmul.mubr.f32.gmra.mrb[0].mxu0 %v69
    %v240 = vpop.f32.mrb[0].mxu0
    %v241 = vadd.f32 0.0, %v240
    %v242 = vpop.f32.mrb[0].mxu0
    %243 = vmatprep.mubr.f32.mxu0 0.0
    %244 = vmatmul.mubr.f32.gmra.mrb[0].mxu0 %v71
    %v245 = vpop.f32.mrb[0].mxu0
    %v246 = vadd.f32 0.0, %v245
    %v247 = vpop.f32.mrb[0].mxu0
    %248 = vdwg.mxu0
    %249 = vmatprep.subr.mxu0 0.0
    %250 = vmatpush1.msra.mxu0 %v72
    %251 = vmatprep.subr.mxu0 0.0
    %252 = vmatpush1.msra.mxu0 %v73
    %253 = vmatprep.subr.mxu0 0.0
    %254 = vmatpush1.msra.mxu0 %v74
    %255 = vmatprep.subr.mxu0 0.0
    %256 = vmatpush1.msra.mxu0 %v75
    %257 = vmatprep.subr.mxu0 0.0
    %258 = vmatpush1.msra.mxu0 %v76
    %259 = vmatprep.subr.mxu0 0.0
    %260 = vmatpush1.msra.mxu0 %v77
    %261 = vmatprep.subr.mxu0 0.0
    %262 = vmatpush1.msra.mxu0 %v78
    %263 = vmatprep.subr.mxu0 0.0
    %264 = vmatpush1.msra.mxu0 %v79
    %265 = vmatprep.subr.mxu0 0.0
    %266 = vmatpush1.msra.mxu0 %v80
    %267 = vmatprep.subr.mxu0 0.0
    %268 = vmatpush1.msra.mxu0 %v81
    %269 = vmatprep.subr.mxu0 0.0
    %270 = vmatpush1.msra.mxu0 %v82
    %271 = vmatprep.subr.mxu0 0.0
    %272 = vmatpush1.msra.mxu0 %v83
    %273 = vmatprep.subr.mxu0 0.0
    %274 = vmatpush1.msra.mxu0 %v84
    %275 = vmatprep.subr.mxu0 0.0
    %276 = vmatpush1.msra.mxu0 %v85
    %277 = vmatprep.subr.mxu0 0.0
    %278 = vmatpush1.msra.mxu0 %v86
    %279 = vmatprep.subr.mxu0 0.0
    %280 = vmatpush1.msra.mxu0 %v87
    %281 = vmatprep.subr.mxu0 0.0
    %282 = vmatpush1.msra.mxu0 0.0
    %283 = vmatprep.subr.mxu0 0.0
    %284 = vmatpush1.msra.mxu0 0.0
    %285 = vmatprep.subr.mxu0 0.0
    %286 = vmatpush1.msra.mxu0 0.0
    %287 = vmatprep.subr.mxu0 0.0
    %288 = vmatpush1.msra.mxu0 0.0
    %289 = vmatprep.subr.mxu0 0.0
    %290 = vmatpush1.msra.mxu0 0.0
    %291 = vmatprep.subr.mxu0 0.0
    %292 = vmatpush1.msra.mxu0 0.0
    %293 = vmatprep.subr.mxu0 0.0
    %294 = vmatpush1.msra.mxu0 0.0
    %295 = vmatprep.subr.mxu0 0.0
    %296 = vmatpush1.msra.mxu0 0.0
    %297 = vmatprep.subr.mxu0 0.0
    %298 = vmatpush1.msra.mxu0 0.0
    %299 = vmatprep.subr.mxu0 0.0
    %300 = vmatpush1.msra.mxu0 0.0
    %301 = vmatprep.subr.mxu0 0.0
    %302 = vmatpush1.msra.mxu0 0.0
    %303 = vmatprep.subr.mxu0 0.0
    %304 = vmatpush1.msra.mxu0 0.0
    %305 = vmatprep.subr.mxu0 0.0
    %306 = vmatpush1.msra.mxu0 0.0
    %307 = vmatprep.subr.mxu0 0.0
    %308 = vmatpush1.msra.mxu0 0.0
    %309 = vmatprep.subr.mxu0 0.0
    %310 = vmatpush1.msra.mxu0 0.0
    %311 = vmatprep.subr.mxu0 0.0
    %312 = vmatpush1.msra.mxu0 0.0
    %313 = vmatprep.mubr.f32.mxu0 0.0
    %314 = vmatmul.mubr.f32.gmra.mrb[0].mxu0 %v40
    %v315 = vpop.f32.mrb[0].mxu0
    %v316 = vadd.f32 %v171, %v315
    %v317 = vpop.f32.mrb[0].mxu0
    %318 = vmatprep.mubr.f32.mxu0 0.0
    %319 = vmatmul.mubr.f32.gmra.mrb[0].mxu0 %v42
    %v320 = vpop.f32.mrb[0].mxu0
    %v321 = vadd.f32 %v176, %v320
    %v322 = vpop.f32.mrb[0].mxu0
    %323 = vmatprep.mubr.f32.mxu0 0.0
    %324 = vmatmul.mubr.f32.gmra.mrb[0].mxu0 %v44
    %v325 = vpop.f32.mrb[0].mxu0
    %v326 = vadd.f32 %v181, %v325
    %v327 = vpop.f32.mrb[0].mxu0
    %328 = vmatprep.mubr.f32.mxu0 0.0
    %329 = vmatmul.mubr.f32.gmra.mrb[0].mxu0 %v46
    %v330 = vpop.f32.mrb[0].mxu0
    %v331 = vadd.f32 %v186, %v330
    %v332 = vpop.f32.mrb[0].mxu0
    %333 = vmatprep.mubr.f32.mxu0 0.0
    %334 = vmatmul.mubr.f32.gmra.mrb[0].mxu0 %v48
    %v335 = vpop.f32.mrb[0].mxu0
    %v336 = vadd.f32 %v191, %v335
    %v337 = vpop.f32.mrb[0].mxu0
    %338 = vmatprep.mubr.f32.mxu0 0.0
    %339 = vmatmul.mubr.f32.gmra.mrb[0].mxu0 %v50
    %v340 = vpop.f32.mrb[0].mxu0
    %v341 = vadd.f32 %v196, %v340
    %v342 = vpop.f32.mrb[0].mxu0
    %343 = vmatprep.mubr.f32.mxu0 0.0
    %344 = vmatmul.mubr.f32.gmra.mrb[0].mxu0 %v52
    %v345 = vpop.f32.mrb[0].mxu0
    %v346 = vadd.f32 %v201, %v345
    %v347 = vpop.f32.mrb[0].mxu0
    %348 = vmatprep.mubr.f32.mxu0 0.0
    %349 = vmatmul.mubr.f32.gmra.mrb[0].mxu0 %v54
    %v350 = vpop.f32.mrb[0].mxu0
    %v351 = vadd.f32 %v206, %v350
    %v352 = vpop.f32.mrb[0].mxu0
    %353 = vmatprep.mubr.f32.mxu0 0.0
    %354 = vmatmul.mubr.f32.gmra.mrb[0].mxu0 %v56
    %v355 = vpop.f32.mrb[0].mxu0
    %v356 = vadd.f32 %v211, %v355
    %v357 = vpop.f32.mrb[0].mxu0
    %358 = vmatprep.mubr.f32.mxu0 0.0
    %359 = vmatmul.mubr.f32.gmra.mrb[0].mxu0 %v58
    %v360 = vpop.f32.mrb[0].mxu0
    %v361 = vadd.f32 %v216, %v360
    %v362 = vpop.f32.mrb[0].mxu0
    %363 = vmatprep.mubr.f32.mxu0 0.0
    %364 = vmatmul.mubr.f32.gmra.mrb[0].mxu0 %v60
    %v365 = vpop.f32.mrb[0].mxu0
    %v366 = vadd.f32 %v221, %v365
    %v367 = vpop.f32.mrb[0].mxu0
    %368 = vmatprep.mubr.f32.mxu0 0.0
    %369 = vmatmul.mubr.f32.gmra.mrb[0].mxu0 %v62
    %v370 = vpop.f32.mrb[0].mxu0
    %v371 = vadd.f32 %v226, %v370
    %v372 = vpop.f32.mrb[0].mxu0
    %373 = vmatprep.mubr.f32.mxu0 0.0
    %374 = vmatmul.mubr.f32.gmra.mrb[0].mxu0 %v64
    %v375 = vpop.f32.mrb[0].mxu0
    %v376 = vadd.f32 %v231, %v375
    %v377 = vpop.f32.mrb[0].mxu0
    %378 = vmatprep.mubr.f32.mxu0 0.0
    %379 = vmatmul.mubr.f32.gmra.mrb[0].mxu0 %v66
    %v380 = vpop.f32.mrb[0].mxu0
    %v381 = vadd.f32 %v236, %v380
    %v382 = vpop.f32.mrb[0].mxu0
    %383 = vmatprep.mubr.f32.mxu0 0.0
    %384 = vmatmul.mubr.f32.gmra.mrb[0].mxu0 %v68
    %v385 = vpop.f32.mrb[0].mxu0
    %v386 = vadd.f32 %v241, %v385
    %v387 = vpop.f32.mrb[0].mxu0
    %388 = vmatprep.mubr.f32.mxu0 0.0
    %389 = vmatmul.mubr.f32.gmra.mrb[0].mxu0 %v70
    %v390 = vpop.f32.mrb[0].mxu0
    %v391 = vadd.f32 %v246, %v390
    %v392 = vpop.f32.mrb[0].mxu0
    %393 = vdwg.mxu0
    %394 = vst [vmem:[#allocation7] sm:$0xff] %v316
    %395 = vst [vmem:[#allocation7 + $0x8] sm:$0xff] %v321
    %396 = vst [vmem:[#allocation7 + $0x10] sm:$0xff] %v326
    %397 = vst [vmem:[#allocation7 + $0x18] sm:$0xff] %v331
    %398 = vst [vmem:[#allocation7 + $0x20] sm:$0xff] %v336
    %399 = vst [vmem:[#allocation7 + $0x28] sm:$0xff] %v341
    %400 = vst [vmem:[#allocation7 + $0x30] sm:$0xff] %v346
    %401 = vst [vmem:[#allocation7 + $0x38] sm:$0xff] %v351
    %402 = vst [vmem:[#allocation7 + $0x40] sm:$0xff] %v356
    %403 = vst [vmem:[#allocation7 + $0x48] sm:$0xff] %v361
    %404 = vst [vmem:[#allocation7 + $0x50] sm:$0xff] %v366
    %405 = vst [vmem:[#allocation7 + $0x58] sm:$0xff] %v371
    %406 = vst [vmem:[#allocation7 + $0x60] sm:$0xff] %v376
    %407 = vst [vmem:[#allocation7 + $0x68] sm:$0xff] %v381
    %408 = vst [vmem:[#allocation7 + $0x70] sm:$0xff] %v386
    %409 = vst [vmem:[#allocation7 + $0x78] sm:$0xff] %v391
    // Predicated region
    $region18: #{tpu_custom_call.1} parent=1 // pred_check
      _
    $region19: #{tpu_custom_call.1} parent=1 // pred_check_branch
      %411 = sbr.rel (0) target = $region21
    $region20: #{tpu_custom_call.1} parent=1 // pred_region
      %s413 = ssub.s32 2048, 2048
      %414 = vsyncadd [#allocation4], %s413
      %s415 = sshll.u32 [#allocation7], 4
      %s416 = int_to_ptr.vmem [resolvable:$true] %s415
      %421 = dma.vmem_to_hbm [thread:$0]  %s416, 2048, %s2, [#allocation4], 128, 128, 8
    $region21: #{tpu_custom_call.1} parent=1 // pred_fallthru
      _
    // Predicated region
    $region22: #{tpu_custom_call.1} parent=1 // pred_check
      _
    $region23: #{tpu_custom_call.1} parent=1 // pred_check_branch
      %423 = sbr.rel (0) target = $region25
    $region24: #{tpu_custom_call.1} parent=1 // pred_region
      %424 = dma.done [#allocation4], 2048
    $region25: #{tpu_custom_call.1} parent=1 // pred_fallthru
      _
    %425 = vsyncpa [#allocation3], 1
    %426 = vsyncpa [#allocation6], 1
    %427 = vsyncpa [#allocation4], 1

</llo_original>
